<compile_context>
chip_gen: v6e
topology: v6e:2x2x1
jax: 0.10.0
libtpu: 0.0.40
codegen_flags: <defaults>
</compile_context>

<pallas_src>
import numpy as np
import jax
import jax.numpy as jnp
from jax.experimental import pallas as pl
from jax.experimental.pallas import tpu as pltpu


# ---------------------------------------------------------------------------
# Deterministic parameter setup (mirrors create_gaussian / create_penalty_mask)
# ---------------------------------------------------------------------------
def create_gaussian_np(size, sigma1):
    # Exact same index range as the PyTorch reference: range(-size//2+1, size//2+1)
    zs = np.array(list(range(-size // 2 + 1, size // 2 + 1)), dtype=np.float64)
    func1 = np.exp(-zs ** 2 / (2.0 * sigma1 ** 2)) / np.sqrt(2.0 * np.pi * sigma1 ** 2)
    return np.outer(func1, func1)


def create_penalty_mask_np(k_size, penalty_scale):
    center_size = k_size // 2 + k_size % 2
    mask = create_gaussian_np(k_size, sigma1=k_size)
    mask = 1.0 - mask / np.max(mask)
    margin = (k_size - center_size) // 2 - 1
    if margin > 0:  # margin == 0 slice is a no-op in the original too
        mask[margin:-margin, margin:-margin] = 0.0
    return (penalty_scale * mask).astype(np.float32)


# ---------------------------------------------------------------------------
# Pallas kernel: |kernel| * pre-scaled mask -> full reduce -> scalar in SMEM
# ---------------------------------------------------------------------------
def _boundaries_loss_kernel(k_ref, m_ref, o_ref):
    # m_ref already holds mask * (1/(k*k)); mask >= 0 so |kernel*mask| == |kernel|*mask.
    o_ref[0, 0] = jnp.sum(jnp.abs(k_ref[...]) * m_ref[...])


def make_boundaries_loss(k_size, penalty_scale=30):
    """Returns (loss_fn, mask) where loss_fn(kernel) == nn.L1Loss()(kernel*mask, 0)."""
    mask_np = create_penalty_mask_np(k_size, penalty_scale)
    # Fold the mean divisor into the constant (non-negative) mask once, at init.
    mask_scaled = jnp.asarray(
        (mask_np.astype(np.float64) / float(k_size * k_size)).astype(np.float32))

    call = pl.pallas_call(
        _boundaries_loss_kernel,
        out_shape=jax.ShapeDtypeStruct((1, 1), jnp.float32),
        # Full-array blocks (block_shape == array shape), raw (k,k) inputs in VMEM;
        # no padding needed — Mosaic handles the sub-(8,128) tile with masked ops.
        in_specs=[
            pl.BlockSpec(memory_space=pltpu.MemorySpace.VMEM),
            pl.BlockSpec(memory_space=pltpu.MemorySpace.VMEM),
        ],
        out_specs=pl.BlockSpec(memory_space=pltpu.MemorySpace.SMEM),
    )

    @jax.jit
    def loss_fn(kernel):
        assert kernel.shape == (k_size, k_size), kernel.shape
        return call(kernel.astype(jnp.float32), mask_scaled)[0, 0]

    return loss_fn, jnp.asarray(mask_np)


if __name__ == "__main__":
    K_SIZE = 13  # typical KernelGAN kernel size

    loss_fn, mask = make_boundaries_loss(K_SIZE, penalty_scale=30)

    key = jax.random.PRNGKey(0)
    kernel = jax.random.normal(key, (K_SIZE, K_SIZE), dtype=jnp.float32)

    loss = jax.block_until_ready(loss_fn(kernel))

    # Pure-JAX reference (matches nn.L1Loss()(kernel * mask, zeros)).
    ref = jnp.mean(jnp.abs(kernel * mask))
    assert np.allclose(np.asarray(loss), np.asarray(ref), rtol=1e-5, atol=1e-7), (loss, ref)

    print("KERNEL_OK")
</pallas_src>

<mosaic_0001>
module attributes {stable_mosaic.version = 11 : i64} {
  func.func @_boundaries_loss_kernel(%arg0: memref<13x13xf32, #tpu.memory_space<vmem>>, %arg1: memref<13x13xf32, #tpu.memory_space<vmem>>, %arg2: memref<1x1xf32, #tpu.memory_space<smem>>) attributes {dimension_semantics = [], scalar_prefetch = 0 : i64, scratch_operands = 0 : i64, tpu.core_type = #tpu.core_type<tc>} {
    %c0 = arith.constant 0 : index
    %c0_0 = arith.constant 0 : index
    %0 = vector.load %arg0[%c0, %c0_0] : memref<13x13xf32, #tpu.memory_space<vmem>>, vector<13x13xf32>
    %1 = math.absf %0 : vector<13x13xf32>
    %c0_1 = arith.constant 0 : index
    %c0_2 = arith.constant 0 : index
    %2 = vector.load %arg1[%c0_1, %c0_2] : memref<13x13xf32, #tpu.memory_space<vmem>>, vector<13x13xf32>
    %3 = arith.mulf %1, %2 : vector<13x13xf32>
    %4 = vector.shape_cast %3 : vector<13x13xf32> to vector<1x13x13xf32>
    %cst = arith.constant dense<0.000000e+00> : vector<1xf32>
    %5 = vector.multi_reduction <add>, %4, %cst [1, 2] : vector<1x13x13xf32> to vector<1xf32>
    %6 = vector.shape_cast %5 : vector<1xf32> to vector<1x1x1xf32>
    %7 = vector.extract %6[0, 0, 0] : f32 from vector<1x1x1xf32>
    %c0_3 = arith.constant 0 : index
    %c0_4 = arith.constant 0 : index
    %8 = memref.load %arg2[%c0_3, %c0_4] : memref<1x1xf32, #tpu.memory_space<smem>>
    memref.store %7, %arg2[%c0_3, %c0_4] : memref<1x1xf32, #tpu.memory_space<smem>>
    return
  }
}

</mosaic_0001>

<llo_original>
// kernel: loss_fn.1
$region0: #{loss_fn.1}
  #allocation0 [shape = 'u32[]', space=smem, size = 0x4, offset = 0x4, fixed_abs, tag = 'smem constant byte address 0x4 - core index']
  #allocation1 [shape = 'u32[144,128]{1,0:T(1,128)}', space=vmem, size = 0x12000, scoped, tag = 'internal scratch']
  %s0 = inlined_call_operand.hbm [shape: f32[13,13], index: 0, kind: input, shape index: {}]
  %s1 = inlined_call_operand.hbm [shape: f32[13,13], index: 1, kind: input, shape index: {}]
  %s2 = inlined_call_operand.hbm [shape: f32[1,1], index: 2, kind: output, shape index: {}]
  %s3 = sld [smem:[#allocation0]]
  $region26: #{loss_fn.1} parent=0
    _
  %s5 = ssub.s32 1, %s3
  %s6 = scalar_select 0, %s5, %s3
  $region1: #{loss_fn.1} parent=0
    #allocation2 [shape = 'u8[8192]{0}', space=vmem, size = 0x2000, scoped, tag = 'input window, operand 0, single buffered']
    #allocation3 [shape = 's32[1]{0}', space=sflag, size = 0x4, scoped, tag = 'scoped memory for loss_fn.1']
    #allocation4 [shape = 's32[1]{0}', space=sflag, size = 0x4, scoped, tag = 'scoped memory for loss_fn.1']
    #allocation5 [shape = 'u8[8192]{0}', space=vmem, size = 0x2000, scoped, tag = 'input window, operand 1, single buffered']
    #allocation6 [shape = 's32[1]{0}', space=sflag, size = 0x4, scoped, tag = 'scoped memory for loss_fn.1']
    #allocation7 [shape = 'u8[512]{0}', space=smem, size = 0x200, scoped, tag = 'output window, operand 0, single buffered']
    %7 = vsyncpa [#allocation3], 0
    %8 = vsyncpa [#allocation6], 0
    %9 = vsyncpa [#allocation4], 0
    // Predicated region
    $region2: #{loss_fn.1} parent=1 // pred_check
      _
    $region3: #{loss_fn.1} parent=1 // pred_check_branch
      %11 = sbr.rel (0) target = $region5
    $region4: #{loss_fn.1} parent=1 // pred_region
      %s13 = ssub.s32 256, 256
      %14 = vsyncadd [#allocation3], %s13
      %s15 = sshll.u32 [#allocation2], 4
      %s16 = int_to_ptr.vmem [resolvable:$true] %s15
      %21 = dma.hbm_to_vmem [thread:$0]  %s0, 256, %s16, [#allocation3], 128, 128, 8
    $region5: #{loss_fn.1} parent=1 // pred_fallthru
      _
    // Predicated region
    $region6: #{loss_fn.1} parent=1 // pred_check
      _
    $region7: #{loss_fn.1} parent=1 // pred_check_branch
      %23 = sbr.rel (0) target = $region9
    $region8: #{loss_fn.1} parent=1 // pred_region
      %s25 = ssub.s32 256, 256
      %26 = vsyncadd [#allocation6], %s25
      %s27 = sshll.u32 [#allocation5], 4
      %s28 = int_to_ptr.vmem [resolvable:$true] %s27
      %33 = dma.hbm_to_vmem [thread:$0]  %s1, 256, %s28, [#allocation6], 128, 128, 8
    $region9: #{loss_fn.1} parent=1 // pred_fallthru
      _
    // Predicated region
    $region10: #{loss_fn.1} parent=1 // pred_check
      _
    $region11: #{loss_fn.1} parent=1 // pred_check_branch
      %35 = sbr.rel (0) target = $region13
    $region12: #{loss_fn.1} parent=1 // pred_region
      %36 = dma.done [#allocation3], 256
    $region13: #{loss_fn.1} parent=1 // pred_fallthru
      _
    // Predicated region
    $region14: #{loss_fn.1} parent=1 // pred_check
      _
    $region15: #{loss_fn.1} parent=1 // pred_check_branch
      %38 = sbr.rel (0) target = $region17
    $region16: #{loss_fn.1} parent=1 // pred_region
      %39 = dma.done [#allocation6], 256
    $region17: #{loss_fn.1} parent=1 // pred_fallthru
      _
    %v40 = vld [vmem:[#allocation2] sm:$0xff]
    %v41 = vld [vmem:[#allocation2 + $0x8] sm:$0x1f]
    %v42 = vand.u32 2147483647, %v40
    %v43 = vand.u32 2147483647, %v41
    %v44 = vld [vmem:[#allocation5] sm:$0xff]
    %v45 = vld [vmem:[#allocation5 + $0x8] sm:$0x1f]
    %v46 = vmul.f32 %v42, %v44
    %v47 = vmul.f32 %v43, %v45
    %vm48 = vcmask 105472
    %v49 = vsel %vm48, %v46, 0.0
    %vm50 = vcmask 102400
    %v51 = vsel %vm50, %v47, 0.0
    %v52 = vadd.f32 %v49, %v51
    %53 = vadd.xlane.f32.xlu0 %v52
    %v54 = vpop.xlane.xlu0 %53
    %v55 = vrot.slane %v54, 4
    %v56 = vadd.f32 %v54, %v55
    %v57 = vrot.slane %v56, 2
    %v58 = vadd.f32 %v56, %v57
    %v59 = vrot.slane %v58, 1
    %v60 = vadd.f32 %v58, %v59
    %s61 = vtos %v60
    %s62 = scalar_lea.smem [#allocation7], 0
    %63 = sst [smem:[%s62]] %s61
    // Predicated region
    $region18: #{loss_fn.1} parent=1 // pred_check
      _
    $region19: #{loss_fn.1} parent=1 // pred_check_branch
      %65 = sbr.rel (0) target = $region21
    $region20: #{loss_fn.1} parent=1 // pred_region
      %s67 = ssub.s32 16, 16
      %68 = vsyncadd [#allocation4], %s67
      %71 = dma.smem_to_hbm [#allocation7], 16, %s2, [#allocation4]
    $region21: #{loss_fn.1} parent=1 // pred_fallthru
      _
    // Predicated region
    $region22: #{loss_fn.1} parent=1 // pred_check
      _
    $region23: #{loss_fn.1} parent=1 // pred_check_branch
      %73 = sbr.rel (0) target = $region25
    $region24: #{loss_fn.1} parent=1 // pred_region
      %74 = dma.done [#allocation4], 16
    $region25: #{loss_fn.1} parent=1 // pred_fallthru
      _
    %75 = sfence
    %76 = vsyncpa [#allocation3], 1
    %77 = vsyncpa [#allocation6], 1
    %78 = vsyncpa [#allocation4], 1

</llo_original>
